<compile_context>
chip_gen: v7x
topology: tpu7x:2x2x1
jax: 0.10.0
libtpu: 0.0.40
codegen_flags: <defaults>
</compile_context>

<pallas_src>
import functools
import math

import jax
import jax.numpy as jnp
from jax.experimental import pallas as pl
from jax.experimental.pallas import tpu as pltpu

F32 = jnp.float32


def _round_up(x, m):
    return ((x + m - 1) // m) * m


# ----------------------------------------------------------------------------
# Kernel: one (bag, instance-tile) grid step.
# ----------------------------------------------------------------------------

def _mil_kernel(x_ref, w1_ref, b1_ref, w2_ref, b2_ref, o_ref,
                best_denom_ref, best_logits_ref, *, n_valid, compute_dtype):
    i = pl.program_id(1)                       # instance-tile index (reduction axis)
    n_tiles = pl.num_programs(1)
    tile_n = x_ref.shape[0]

    # Reset the per-bag online-argmax carry at the first instance tile of each bag.
    @pl.when(i == 0)
    def _():
        best_denom_ref[...] = jnp.full_like(best_denom_ref, jnp.inf)
        best_logits_ref[...] = jnp.zeros_like(best_logits_ref)

    # fc: Linear(D, 512) + ReLU   (Dropout is identity in eval mode).
    x = x_ref[...].astype(compute_dtype)                                   # (T, D)
    h = jnp.dot(x, w1_ref[...], preferred_element_type=jnp.float32) + b1_ref[...]
    h = jnp.maximum(h, 0.0)                                                # (T, 512) f32

    # classifiers: Linear(512, C)
    logits = jnp.dot(h.astype(compute_dtype), w2_ref[...],
                     preferred_element_type=jnp.float32) + b2_ref[...]     # (T, C) f32

    # Per-row max softmax prob == 1 / sum(exp(logits - rowmax)); the flattened-argmax
    # winner is therefore the row with the smallest denom (first occurrence on ties).
    lmax = jnp.max(logits, axis=-1, keepdims=True)                         # (T, 1)
    denom = jnp.sum(jnp.exp(logits - lmax), axis=-1, keepdims=True)        # (T, 1)

    row_ids = jax.lax.broadcasted_iota(jnp.int32, denom.shape, 0)          # (T, 1)
    valid = (i * tile_n + row_ids) < n_valid                               # mask N padding
    denom = jnp.where(valid, denom, jnp.inf)

    tile_min = jnp.min(denom, axis=0, keepdims=True)                       # (1, 1)
    win_row = jnp.min(jnp.where(denom == tile_min, row_ids, tile_n),
                      axis=0, keepdims=True)                               # (1, 1) first occurrence
    win_logits = jnp.sum(jnp.where(row_ids == win_row, logits, 0.0),
                         axis=0, keepdims=True)                            # (1, C)

    # Online update of the running winner (strict '<' preserves first occurrence).
    prev = best_denom_ref[...]
    better = tile_min < prev                                               # (1, 1) bool
    best_denom_ref[...] = jnp.where(better, tile_min, prev)
    best_logits_ref[...] = jnp.where(better, win_logits, best_logits_ref[...])

    @pl.when(i == n_tiles - 1)
    def _():
        o_ref[...] = jax.nn.sigmoid(best_logits_ref[...])                  # hazards (1, C)


# ----------------------------------------------------------------------------
# Wrappers
# ----------------------------------------------------------------------------

def _vmem_estimate(tile_n, d, hidden, c, compute_itemsize):
    c_pad = _round_up(c, 128)
    x_bufs = 2 * tile_n * d * 4                                  # double-buffered x tiles (f32)
    weights = (d * hidden + hidden * c_pad) * compute_itemsize + (hidden + c_pad) * 4
    temps = tile_n * d * compute_itemsize                        # x cast
    temps += tile_n * hidden * (4 + compute_itemsize)            # h (f32) + cast
    temps += 4 * tile_n * c_pad * 4                              # logits / exp / masks
    return x_bufs + weights + temps + (2 << 20)                  # headroom


def mil_forward_bags(x, params, *, tile_n=512, compute_dtype=jnp.bfloat16):
    """x: (B, N, path_input_dim) batch of bags -> hazards (B, n_classes)."""
    B, N, D = x.shape
    hidden = params["w1"].shape[1]
    C = params["w2"].shape[1]

    # Tile the instance axis; pad N (padded rows are masked out of the argmax).
    tile_n = max(8, min(int(tile_n), _round_up(N, 8)))
    tile_n = _round_up(tile_n, 8)
    n_pad = _round_up(N, tile_n)
    if n_pad != N:
        x = jnp.pad(x, ((0, 0), (0, n_pad - N), (0, 0)))

    w1 = params["w1"].astype(compute_dtype)
    w2 = params["w2"].astype(compute_dtype)
    b1 = params["b1"].astype(F32)
    b2 = params["b2"].astype(F32)

    kernel = functools.partial(_mil_kernel, n_valid=N, compute_dtype=compute_dtype)

    itemsize = jnp.dtype(compute_dtype).itemsize
    est = _vmem_estimate(tile_n, D, hidden, C, itemsize)
    vmem_limit = int(min(48 * 2**20, max(2 * est, 16 * 2**20)))

    grid = (B, n_pad // tile_n)
    out = pl.pallas_call(
        kernel,
        out_shape=jax.ShapeDtypeStruct((B, 1, C), F32),
        grid_spec=pltpu.PrefetchScalarGridSpec(
            num_scalar_prefetch=0,
            grid=grid,
            in_specs=[
                # x: advances with the instance-tile axis.
                pl.BlockSpec((None, tile_n, D), lambda b, i: (b, i, 0)),
                # weights / biases: constant index maps -> fetched once, resident.
                pl.BlockSpec((D, hidden), lambda b, i: (0, 0)),
                pl.BlockSpec((1, hidden), lambda b, i: (0, 0)),
                pl.BlockSpec((hidden, C), lambda b, i: (0, 0)),
                pl.BlockSpec((1, C), lambda b, i: (0, 0)),
            ],
            out_specs=pl.BlockSpec((None, 1, C), lambda b, i: (b, 0, 0)),
            scratch_shapes=[
                pltpu.VMEM((1, 1), F32),   # running min softmax denom (== 1/max prob)
                pltpu.VMEM((1, C), F32),   # running winning-row logits
            ],
        ),
        compiler_params=pltpu.CompilerParams(
            dimension_semantics=("parallel", "arbitrary"),
            vmem_limit_bytes=vmem_limit,
        ),
        cost_estimate=pl.CostEstimate(
            flops=int(2 * B * N * D * hidden + 2 * B * N * hidden * C),
            transcendentals=int(B * N * C + B * C),
            bytes_accessed=int(B * n_pad * D * 4
                               + (D * hidden + hidden * C) * itemsize
                               + (hidden + C) * 4 + B * C * 4),
        ),
    )(x, w1, b1, w2, b2)
    return out[:, 0, :]                                          # (B, C)


def mil_forward(x, params, **kwargs):
    """Single bag, matching the PyTorch module: x (N, D) -> hazards (1, n_classes)."""
    return mil_forward_bags(x[None], params, **kwargs)


# ----------------------------------------------------------------------------
# Parameter init: xavier_normal Linear weights, zero biases (initialize_weights).
# ----------------------------------------------------------------------------

def _xavier(key, fan_in, fan_out):
    std = math.sqrt(2.0 / (fan_in + fan_out))
    return (std * jax.random.normal(key, (fan_in, fan_out))).astype(F32)


def init_params(key, path_input_dim, n_classes, hidden=512):
    k1, k2 = jax.random.split(key)
    return dict(
        w1=_xavier(k1, path_input_dim, hidden), b1=jnp.zeros((1, hidden), F32),
        w2=_xavier(k2, hidden, n_classes),      b2=jnp.zeros((1, n_classes), F32),
    )


# ----------------------------------------------------------------------------
# Pure-JAX reference (mirrors the kernel's matmul precision for comparison).
# ----------------------------------------------------------------------------

def mil_reference(x, params, compute_dtype=jnp.bfloat16):
    w1 = params["w1"].astype(compute_dtype)
    w2 = params["w2"].astype(compute_dtype)
    h = jnp.dot(x.astype(compute_dtype), w1, preferred_element_type=jnp.float32) + params["b1"]
    h = jnp.maximum(h, 0.0)
    logits = jnp.dot(h.astype(compute_dtype), w2, preferred_element_type=jnp.float32) + params["b2"]
    probs = jax.nn.softmax(logits, axis=1)
    m = jnp.argmax(probs.reshape(-1))
    top_row = m // logits.shape[1]
    return jax.nn.sigmoid(logits[top_row][None, :])


if __name__ == "__main__":
    B = 3               # bags batched into one pallas_call
    N = 40              # instances per bag (not a tile multiple -> exercises masking)
    PATH_DIM = 256      # path_input_dim (kept small)
    HIDDEN = 512        # hard-coded in the module's fc layer
    N_CLASSES = 4       # module asserts n_classes > 2

    root = jax.random.PRNGKey(0)
    k_x, k_p = jax.random.split(root)
    x = jax.random.normal(k_x, (B, N, PATH_DIM), dtype=F32)
    params = init_params(k_p, PATH_DIM, N_CLASSES, HIDDEN)

    # Batched bags, small tile to exercise the instance grid + padding + carry.
    hazards = mil_forward_bags(x, params, tile_n=16)
    jax.block_until_ready(hazards)
    assert hazards.shape == (B, N_CLASSES)
    assert bool(jnp.all(jnp.isfinite(hazards)))

    ref = jnp.concatenate([mil_reference(x[b], params) for b in range(B)], axis=0)
    assert bool(jnp.allclose(hazards, ref, atol=1e-4, rtol=1e-4)), (hazards, ref)

    # Single bag in f32 (bit-faithful to the PyTorch module's precision).
    h1 = mil_forward(x[0], params, compute_dtype=jnp.float32)
    jax.block_until_ready(h1)
    ref1 = mil_reference(x[0], params, compute_dtype=jnp.float32)
    assert h1.shape == (1, N_CLASSES)
    assert bool(jnp.allclose(h1, ref1, atol=2e-5, rtol=2e-5)), (h1, ref1)

    print("KERNEL_OK")
</pallas_src>

<mosaic_0001>
module attributes {stable_mosaic.version = 11 : i64} {
  func.func @_mil_kernel(%arg0: i32, %arg1: i32, %arg2: memref<1x16x256xf32, #tpu.memory_space<vmem>>, %arg3: memref<256x512xbf16, #tpu.memory_space<vmem>>, %arg4: memref<1x512xf32, #tpu.memory_space<vmem>>, %arg5: memref<512x4xbf16, #tpu.memory_space<vmem>>, %arg6: memref<1x4xf32, #tpu.memory_space<vmem>>, %arg7: memref<1x1x4xf32, #tpu.memory_space<vmem>>, %arg8: memref<1x1xf32, #tpu.memory_space<vmem>>, %arg9: memref<1x4xf32, #tpu.memory_space<vmem>>) attributes {dimension_semantics = [#tpu.dimension_semantics<parallel>, #tpu.dimension_semantics<arbitrary>], iteration_bounds = array<i64: 3, 3>, scalar_prefetch = 0 : i64, scratch_operands = 2 : i64, tpu.core_type = #tpu.core_type<tc>, window_params = [{transform_indices = @transform_0, window_bounds = array<i64: 1, 16, 256>}, {pipeline_mode = #tpu.pipeline_mode<synchronous>, transform_indices = @transform_1, window_bounds = array<i64: 256, 512>}, {pipeline_mode = #tpu.pipeline_mode<synchronous>, transform_indices = @transform_2, window_bounds = array<i64: 1, 512>}, {pipeline_mode = #tpu.pipeline_mode<synchronous>, transform_indices = @transform_3, window_bounds = array<i64: 512, 4>}, {pipeline_mode = #tpu.pipeline_mode<synchronous>, transform_indices = @transform_4, window_bounds = array<i64: 1, 4>}, {transform_indices = @transform_5, window_bounds = array<i64: 1, 1, 4>}]} {
    %c0_i32 = arith.constant 0 : i32
    %0 = arith.cmpi eq, %arg1, %c0_i32 : i32
    %1 = arith.extui %0 : i1 to i32
    %c0_i32_0 = arith.constant 0 : i32
    %2 = arith.cmpi ne, %1, %c0_i32_0 : i32
    scf.if %2 {
      %cst_30 = arith.constant 0x7F800000 : f32
      %62 = vector.broadcast %cst_30 : f32 to vector<1x1xf32>
      %c0_31 = arith.constant 0 : index
      %c0_32 = arith.constant 0 : index
      %63 = vector.load %arg8[%c0_31, %c0_32] : memref<1x1xf32, #tpu.memory_space<vmem>>, vector<1x1xf32>
      tpu.vector_store %arg8[%c0_31, %c0_32], %62 {strides = array<i32>} : memref<1x1xf32, #tpu.memory_space<vmem>>, vector<1x1xf32>,
      %cst_33 = arith.constant 0.000000e+00 : f32
      %64 = vector.broadcast %cst_33 : f32 to vector<1x4xf32>
      %c0_34 = arith.constant 0 : index
      %c0_35 = arith.constant 0 : index
      %65 = vector.load %arg9[%c0_34, %c0_35] : memref<1x4xf32, #tpu.memory_space<vmem>>, vector<1x4xf32>
      tpu.vector_store %arg9[%c0_34, %c0_35], %64 {strides = array<i32>} : memref<1x4xf32, #tpu.memory_space<vmem>>, vector<1x4xf32>,
    } else {
    }
    %c0 = arith.constant 0 : index
    %c0_1 = arith.constant 0 : index
    %c0_2 = arith.constant 0 : index
    %3 = vector.load %arg2[%c0, %c0_1, %c0_2] : memref<1x16x256xf32, #tpu.memory_space<vmem>>, vector<1x16x256xf32>
    %4 = vector.shape_cast %3 : vector<1x16x256xf32> to vector<16x256xf32>
    %5 = arith.truncf %4 : vector<16x256xf32> to vector<16x256xbf16>
    %c0_3 = arith.constant 0 : index
    %c0_4 = arith.constant 0 : index
    %6 = vector.load %arg3[%c0_3, %c0_4] : memref<256x512xbf16, #tpu.memory_space<vmem>>, vector<256x512xbf16>
    %cst = arith.constant dense<0.000000e+00> : vector<16x512xf32>
    %7 = tpu.matmul %5, %6, %cst {dimension_numbers = #tpu.dot_dimension_numbers<[1], [0], [0], [1], [0, 0, 1, 1], [], []>} : vector<16x256xbf16>, vector<256x512xbf16>, vector<16x512xf32> -> vector<16x512xf32>
    %c0_5 = arith.constant 0 : index
    %c0_6 = arith.constant 0 : index
    %8 = vector.load %arg4[%c0_5, %c0_6] : memref<1x512xf32, #tpu.memory_space<vmem>>, vector<1x512xf32>
    %9 = vector.broadcast %8 : vector<1x512xf32> to vector<16x512xf32>
    %10 = arith.addf %7, %9 : vector<16x512xf32>
    %cst_7 = arith.constant 0.000000e+00 : f32
    %11 = vector.broadcast %cst_7 : f32 to vector<16x512xf32>
    %12 = arith.maximumf %10, %11 : vector<16x512xf32>
    %13 = arith.truncf %12 : vector<16x512xf32> to vector<16x512xbf16>
    %c0_8 = arith.constant 0 : index
    %c0_9 = arith.constant 0 : index
    %14 = vector.load %arg5[%c0_8, %c0_9] : memref<512x4xbf16, #tpu.memory_space<vmem>>, vector<512x4xbf16>
    %cst_10 = arith.constant dense<0.000000e+00> : vector<16x4xf32>
    %15 = tpu.matmul %13, %14, %cst_10 {dimension_numbers = #tpu.dot_dimension_numbers<[1], [0], [0], [1], [0, 0, 1, 1], [], []>} : vector<16x512xbf16>, vector<512x4xbf16>, vector<16x4xf32> -> vector<16x4xf32>
    %c0_11 = arith.constant 0 : index
    %c0_12 = arith.constant 0 : index
    %16 = vector.load %arg6[%c0_11, %c0_12] : memref<1x4xf32, #tpu.memory_space<vmem>>, vector<1x4xf32>
    %17 = vector.broadcast %16 : vector<1x4xf32> to vector<16x4xf32>
    %18 = arith.addf %15, %17 : vector<16x4xf32>
    %cst_13 = arith.constant dense<0xFF800000> : vector<16xf32>
    %19 = vector.multi_reduction <maximumf>, %18, %cst_13 [1] : vector<16x4xf32> to vector<16xf32>
    %20 = vector.shape_cast %19 : vector<16xf32> to vector<16x1xf32>
    %21 = vector.broadcast %20 : vector<16x1xf32> to vector<16x4xf32>
    %22 = arith.subf %18, %21 : vector<16x4xf32>
    %23 = math.exp %22 : vector<16x4xf32>
    %cst_14 = arith.constant dense<0.000000e+00> : vector<16xf32>
    %24 = vector.multi_reduction <add>, %23, %cst_14 [1] : vector<16x4xf32> to vector<16xf32>
    %25 = vector.shape_cast %24 : vector<16xf32> to vector<16x1xf32>
    %26 = tpu.iota {dimensions = array<i32: 0>} : vector<16x1xi32>
    %c16_i32 = arith.constant 16 : i32
    %27 = arith.muli %arg1, %c16_i32 : i32
    %28 = vector.broadcast %27 : i32 to vector<16x1xi32>
    %29 = arith.addi %28, %26 : vector<16x1xi32>
    %c40_i32 = arith.constant 40 : i32
    %30 = vector.broadcast %c40_i32 : i32 to vector<16x1xi32>
    %31 = arith.cmpi slt, %29, %30 : vector<16x1xi32>
    %cst_15 = arith.constant 0x7F800000 : f32
    %32 = vector.broadcast %cst_15 : f32 to vector<16x1xf32>
    %33 = arith.select %31, %25, %32 : vector<16x1xi1>, vector<16x1xf32>
    %cst_16 = arith.constant dense<0x7F800000> : vector<1xf32>
    %34 = vector.multi_reduction <minimumf>, %33, %cst_16 [0] : vector<16x1xf32> to vector<1xf32>
    %35 = vector.shape_cast %34 : vector<1xf32> to vector<1x1xf32>
    %36 = vector.broadcast %35 : vector<1x1xf32> to vector<16x1xf32>
    %37 = arith.cmpf oeq, %33, %36 : vector<16x1xf32>
    %c16_i32_17 = arith.constant 16 : i32
    %38 = vector.broadcast %c16_i32_17 : i32 to vector<16x1xi32>
    %39 = arith.select %37, %26, %38 : vector<16x1xi1>, vector<16x1xi32>
    %cst_18 = arith.constant dense<2147483647> : vector<1xi32>
    %40 = vector.multi_reduction <minsi>, %39, %cst_18 [0] : vector<16x1xi32> to vector<1xi32>
    %41 = vector.shape_cast %40 : vector<1xi32> to vector<1x1xi32>
    %42 = vector.broadcast %41 : vector<1x1xi32> to vector<16x1xi32>
    %43 = arith.cmpi eq, %26, %42 : vector<16x1xi32>
    %cst_19 = arith.constant 0.000000e+00 : f32
    %44 = vector.shape_cast %43 : vector<16x1xi1> to vector<16x1xi1>
    %45 = vector.broadcast %44 : vector<16x1xi1> to vector<16x4xi1>
    %46 = vector.broadcast %cst_19 : f32 to vector<16x4xf32>
    %47 = arith.select %45, %18, %46 : vector<16x4xi1>, vector<16x4xf32>
    %cst_20 = arith.constant dense<0.000000e+00> : vector<4xf32>
    %48 = vector.multi_reduction <add>, %47, %cst_20 [0] : vector<16x4xf32> to vector<4xf32>
    %49 = vector.shape_cast %48 : vector<4xf32> to vector<1x4xf32>
    %c0_21 = arith.constant 0 : index
    %c0_22 = arith.constant 0 : index
    %50 = vector.load %arg8[%c0_21, %c0_22] : memref<1x1xf32, #tpu.memory_space<vmem>>, vector<1x1xf32>
    %51 = arith.cmpf olt, %35, %50 : vector<1x1xf32>
    %52 = arith.select %51, %35, %50 : vector<1x1xi1>, vector<1x1xf32>
    %c0_23 = arith.constant 0 : index
    %c0_24 = arith.constant 0 : index
    %53 = vector.load %arg8[%c0_23, %c0_24] : memref<1x1xf32, #tpu.memory_space<vmem>>, vector<1x1xf32>
    tpu.vector_store %arg8[%c0_23, %c0_24], %52 {strides = array<i32>} : memref<1x1xf32, #tpu.memory_space<vmem>>, vector<1x1xf32>,
    %c0_25 = arith.constant 0 : index
    %c0_26 = arith.constant 0 : index
    %54 = vector.load %arg9[%c0_25, %c0_26] : memref<1x4xf32, #tpu.memory_space<vmem>>, vector<1x4xf32>
    %55 = vector.shape_cast %51 : vector<1x1xi1> to vector<1x1xi1>
    %56 = vector.broadcast %55 : vector<1x1xi1> to vector<1x4xi1>
    %57 = arith.select %56, %49, %54 : vector<1x4xi1>, vector<1x4xf32>
    %c0_27 = arith.constant 0 : index
    %c0_28 = arith.constant 0 : index
    %58 = vector.load %arg9[%c0_27, %c0_28] : memref<1x4xf32, #tpu.memory_space<vmem>>, vector<1x4xf32>
    tpu.vector_store %arg9[%c0_27, %c0_28], %57 {strides = array<i32>} : memref<1x4xf32, #tpu.memory_space<vmem>>, vector<1x4xf32>,
    %c2_i32 = arith.constant 2 : i32
    %59 = arith.cmpi eq, %arg1, %c2_i32 : i32
    %60 = arith.extui %59 : i1 to i32
    %c0_i32_29 = arith.constant 0 : i32
    %61 = arith.cmpi ne, %60, %c0_i32_29 : i32
    scf.if %61 {
      %c0_30 = arith.constant 0 : index
      %c0_31 = arith.constant 0 : index
      %62 = vector.load %arg9[%c0_30, %c0_31] : memref<1x4xf32, #tpu.memory_space<vmem>>, vector<1x4xf32>
      %63 = arith.negf %62 : vector<1x4xf32>
      %64 = math.exp %63 : vector<1x4xf32>
      %cst_32 = arith.constant 1.000000e+00 : f32
      %65 = vector.broadcast %cst_32 : f32 to vector<1x4xf32>
      %66 = arith.addf %65, %64 : vector<1x4xf32>
      %67 = arith.divf %65, %66 : vector<1x4xf32>
      %c0_33 = arith.constant 0 : index
      %c0_34 = arith.constant 0 : index
      %c0_35 = arith.constant 0 : index
      %68 = vector.load %arg7[%c0_33, %c0_34, %c0_35] : memref<1x1x4xf32, #tpu.memory_space<vmem>>, vector<1x1x4xf32>
      %69 = vector.shape_cast %68 : vector<1x1x4xf32> to vector<1x4xf32>
      %70 = vector.shape_cast %67 : vector<1x4xf32> to vector<1x1x4xf32>
      tpu.vector_store %arg7[%c0_33, %c0_34, %c0_35], %70 {strides = array<i32>} : memref<1x1x4xf32, #tpu.memory_space<vmem>>, vector<1x1x4xf32>,
    } else {
    }
    return
  }
  func.func @transform_0(%arg0: i32, %arg1: i32) -> (i32, i32, i32) {
    %c0_i32 = arith.constant 0 : i32
    %c0_i32_0 = arith.constant 0 : i32
    return %arg0, %arg1, %c0_i32 : i32, i32, i32
  }
  func.func @transform_1(%arg0: i32, %arg1: i32) -> (i32, i32) {
    %c0_i32 = arith.constant 0 : i32
    %c0_i32_0 = arith.constant 0 : i32
    %c0_i32_1 = arith.constant 0 : i32
    return %c0_i32, %c0_i32_0 : i32, i32
  }
  func.func @transform_2(%arg0: i32, %arg1: i32) -> (i32, i32) {
    %c0_i32 = arith.constant 0 : i32
    %c0_i32_0 = arith.constant 0 : i32
    %c0_i32_1 = arith.constant 0 : i32
    return %c0_i32, %c0_i32_0 : i32, i32
  }
  func.func @transform_3(%arg0: i32, %arg1: i32) -> (i32, i32) {
    %c0_i32 = arith.constant 0 : i32
    %c0_i32_0 = arith.constant 0 : i32
    %c0_i32_1 = arith.constant 0 : i32
    return %c0_i32, %c0_i32_0 : i32, i32
  }
  func.func @transform_4(%arg0: i32, %arg1: i32) -> (i32, i32) {
    %c0_i32 = arith.constant 0 : i32
    %c0_i32_0 = arith.constant 0 : i32
    %c0_i32_1 = arith.constant 0 : i32
    return %c0_i32, %c0_i32_0 : i32, i32
  }
  func.func @transform_5(%arg0: i32, %arg1: i32) -> (i32, i32, i32) {
    %c0_i32 = arith.constant 0 : i32
    %c0_i32_0 = arith.constant 0 : i32
    %c0_i32_1 = arith.constant 0 : i32
    return %arg0, %c0_i32, %c0_i32_0 : i32, i32, i32
  }
}

</mosaic_0001>

<llo_original>
// kernel: tpu_custom_call.1
$region0: #{tpu_custom_call.1}
  #allocation0 [shape = 'u32[]', space=smem, size = 0x4, offset = 0x4, fixed_abs, tag = 'smem constant byte address 0x4 - core index']
  #allocation1 [shape = 'u32[144,128]{1,0:T(1,128)}', space=vmem, size = 0x12000, scoped, tag = 'internal scratch']
  #allocation2 [shape = 'f32[1,1]{1,0:T(1,128)}', space=vmem, size = 0x200, scoped, tag = 'scratch operand']
  #allocation3 [shape = 'f32[1,4]{1,0:T(1,128)}', space=vmem, size = 0x200, scoped, tag = 'scratch operand']
  %s0 = inlined_call_operand.hbm [shape: f32[3,48,256], index: 0, kind: input, shape index: {}]
  %s1 = inlined_call_operand.hbm [shape: bf16[256,512], index: 1, kind: input, shape index: {}]
  %s2 = inlined_call_operand.vmem [shape: f32[1,512], index: 2, kind: input, shape index: {}]
  %s3 = inlined_call_operand.vmem [shape: bf16[512,4], index: 3, kind: input, shape index: {}]
  %s4 = inlined_call_operand.vmem [shape: f32[1,4], index: 4, kind: input, shape index: {}]
  %s5 = inlined_call_operand.hbm [shape: f32[3,1,4], index: 5, kind: output, shape index: {}]
  %s6 = sld [smem:[#allocation0]]
  $region69: #{tpu_custom_call.1} parent=0
    _
  %s8 = ssub.s32 1, %s6
  %s9 = scalar_select 0, %s8, %s6
  $region1: #{tpu_custom_call.1} parent=0
    #allocation4 [shape = 'u8[32768]{0}', space=vmem, size = 0x8000, scoped, tag = 'input window, operand 0']
    #allocation5 [shape = 's32[2]{0}', space=sflag, size = 0x8, scoped, tag = 'scoped memory for tpu_custom_call.1']
    #allocation6 [shape = 's32[2]{0}', space=sflag, size = 0x8, scoped, tag = 'scoped memory for tpu_custom_call.1']
    #allocation7 [shape = 'u8[262144]{0}', space=vmem, size = 0x40000, scoped, tag = 'input window, operand 1, single buffered']
    #allocation8 [shape = 's32[1]{0}', space=sflag, size = 0x4, scoped, tag = 'scoped memory for tpu_custom_call.1']
    #allocation9 [shape = 'u8[1024]{0}', space=vmem, size = 0x400, scoped, tag = 'output window, operand 0']
    %10 = vsyncpa [#allocation5], 0
    %s11 = scalar_lea.sflag [#allocation5], 1
    %12 = vsyncpa %s11, 0
    %13 = vsyncpa [#allocation8], 0
    %14 = vsyncpa [#allocation6], 0
    %s15 = scalar_lea.sflag [#allocation6], 1
    %16 = vsyncpa %s15, 0
    loop: start=0, step=1, limit=11
    $region2: #{tpu_custom_call.1} parent=1 // loop_pre_header
      _
    $region3: #{tpu_custom_call.1} parent=1 // loop_header
      %s18 = sphi 0, %s22
      %p19 = scmp.ge.s32.totalorder %s18, 11
      %s25 = sphi 0, %s37
      %s26 = sphi 0, %s33
      %s27 = sphi 0, %s25
      %s28 = sphi 0, %s26
      %s29 = sphi 0, %s27
      %s30 = sphi 0, %s28
      %s42 = sphi 0, %s44
      %s45 = sphi 0, %s42
      %s46 = sphi 0, %s45
      %s62 = sphi 0, %s46
      %s66 = sphi 0, %s66
      %s68 = sphi 0, %s66
      %s69 = sphi 0, %s68
      %s83 = sphi 0, %s69
      %s87 = sphi 0, %s87
      %s89 = sphi 0, %s87
      %s90 = sphi 0, %s89
      %s104 = sphi 0, %s90
      %s108 = sphi 0, %s108
      %s110 = sphi 0, %s108
      %s111 = sphi 0, %s110
      %s125 = sphi 0, %s111
      %s129 = sphi 0, %s129
      %s131 = sphi 0, %s129
      %s132 = sphi 0, %s131
      %s146 = sphi 0, %s132
      %s152 = sphi 0, %s154
      %s155 = sphi 0, %s152
      %s156 = sphi 0, %s155
      %s172 = sphi 0, %s156
    $region4: #{tpu_custom_call.1} parent=1 // loop_header_branch
      %21 = sbr.rel (%p19) target = $region8
    $region5: #{tpu_custom_call.1} parent=1 // loop_body
      %s23 = ssub.s32 %s18, 1
      %s24 = ssub.s32 %s18, 2
      %s31 = sadd.s32 1, %s26
      %p32 = scmp.ge.s32.totalorder %s31, 3
      %s33 = scalar_select %p32, 0, %s31
      %s34 = sadd.s32 1, %s25
      %s35 = scalar_select %p32, %s34, %s25
      %p36 = scmp.ge.s32.totalorder %s35, 3
      %s37 = scalar_select %p36, 0, %s35
      %s38 = ssub.s32 %s25, %s37
      %s39 = ssub.s32 %s26, %s33
      %s40 = sor.u32 %s38, %s39
      %p41 = scmp.eq.s32.totalorder %s40, 0
      %s43 = sadd.s32 %s42, 1
      %s44 = scalar_select %p41, %s42, %s43
      %p47 = pneg %p41
      %p48 = scmp.eq.s32.totalorder %s18, 8
      %p49 = por %p47, %p48
      %p50 = scmp.ne.s32.totalorder %s42, %s45
      %p51 = scmp.eq.s32.totalorder %s18, 0
      %p52 = por %p50, %p51
      %p53 = scmp.ne.s32.totalorder %s42, %s45
      %p54 = scmp.eq.s32.totalorder %s23, 8
      %p55 = por %p53, %p54
      %p56 = scmp.ne.s32.totalorder %s45, %s46
      %p57 = scmp.eq.s32.totalorder %s23, 0
      %p58 = por %p56, %p57
      %p59 = scmp.ne.s32.totalorder %s45, %s46
      %p60 = scmp.eq.s32.totalorder %s24, 8
      %p61 = por %p59, %p60
      %p63 = scmp.ne.s32.totalorder %s46, %s62
      %p64 = scmp.eq.s32.totalorder %s24, 0
      %p65 = por %p63, %p64
      %s67 = sadd.s32 %s66, 1
      %p70 = scmp.eq.s32.totalorder %s18, 8
      %p71 = scmp.ne.s32.totalorder %s66, %s68
      %p72 = scmp.eq.s32.totalorder %s18, 0
      %p73 = por %p71, %p72
      %p74 = scmp.ne.s32.totalorder %s66, %s68
      %p75 = scmp.eq.s32.totalorder %s23, 8
      %p76 = por %p74, %p75
      %p77 = scmp.ne.s32.totalorder %s68, %s69
      %p78 = scmp.eq.s32.totalorder %s23, 0
      %p79 = por %p77, %p78
      %p80 = scmp.ne.s32.totalorder %s68, %s69
      %p81 = scmp.eq.s32.totalorder %s24, 8
      %p82 = por %p80, %p81
      %p84 = scmp.ne.s32.totalorder %s69, %s83
      %p85 = scmp.eq.s32.totalorder %s24, 0
      %p86 = por %p84, %p85
      %s88 = sadd.s32 %s87, 1
      %p91 = scmp.eq.s32.totalorder %s18, 8
      %p92 = scmp.ne.s32.totalorder %s87, %s89
      %p93 = scmp.eq.s32.totalorder %s18, 0
      %p94 = por %p92, %p93
      %p95 = scmp.ne.s32.totalorder %s87, %s89
      %p96 = scmp.eq.s32.totalorder %s23, 8
      %p97 = por %p95, %p96
      %p98 = scmp.ne.s32.totalorder %s89, %s90
      %p99 = scmp.eq.s32.totalorder %s23, 0
      %p100 = por %p98, %p99
      %p101 = scmp.ne.s32.totalorder %s89, %s90
      %p102 = scmp.eq.s32.totalorder %s24, 8
      %p103 = por %p101, %p102
      %p105 = scmp.ne.s32.totalorder %s90, %s104
      %p106 = scmp.eq.s32.totalorder %s24, 0
      %p107 = por %p105, %p106
      %s109 = sadd.s32 %s108, 1
      %p112 = scmp.eq.s32.totalorder %s18, 8
      %p113 = scmp.ne.s32.totalorder %s108, %s110
      %p114 = scmp.eq.s32.totalorder %s18, 0
      %p115 = por %p113, %p114
      %p116 = scmp.ne.s32.totalorder %s108, %s110
      %p117 = scmp.eq.s32.totalorder %s23, 8
      %p118 = por %p116, %p117
      %p119 = scmp.ne.s32.totalorder %s110, %s111
      %p120 = scmp.eq.s32.totalorder %s23, 0
      %p121 = por %p119, %p120
      %p122 = scmp.ne.s32.totalorder %s110, %s111
      %p123 = scmp.eq.s32.totalorder %s24, 8
      %p124 = por %p122, %p123
      %p126 = scmp.ne.s32.totalorder %s111, %s125
      %p127 = scmp.eq.s32.totalorder %s24, 0
      %p128 = por %p126, %p127
      %s130 = sadd.s32 %s129, 1
      %p133 = scmp.eq.s32.totalorder %s18, 8
      %p134 = scmp.ne.s32.totalorder %s129, %s131
      %p135 = scmp.eq.s32.totalorder %s18, 0
      %p136 = por %p134, %p135
      %p137 = scmp.ne.s32.totalorder %s129, %s131
      %p138 = scmp.eq.s32.totalorder %s23, 8
      %p139 = por %p137, %p138
      %p140 = scmp.ne.s32.totalorder %s131, %s132
      %p141 = scmp.eq.s32.totalorder %s23, 0
      %p142 = por %p140, %p141
      %p143 = scmp.ne.s32.totalorder %s131, %s132
      %p144 = scmp.eq.s32.totalorder %s24, 8
      %p145 = por %p143, %p144
      %p147 = scmp.ne.s32.totalorder %s132, %s146
      %p148 = scmp.eq.s32.totalorder %s24, 0
      %p149 = por %p147, %p148
      %s150 = ssub.s32 %s25, %s37
      %p151 = scmp.eq.s32.totalorder %s150, 0
      %s153 = sadd.s32 %s152, 1
      %s154 = scalar_select %p151, %s152, %s153
      %p157 = pneg %p151
      %p158 = scmp.eq.s32.totalorder %s18, 8
      %p159 = por %p157, %p158
      %p160 = scmp.ne.s32.totalorder %s152, %s155
      %p161 = scmp.eq.s32.totalorder %s18, 0
      %p162 = por %p160, %p161
      %p163 = scmp.ne.s32.totalorder %s152, %s155
      %p164 = scmp.eq.s32.totalorder %s23, 8
      %p165 = por %p163, %p164
      %p166 = scmp.ne.s32.totalorder %s155, %s156
      %p167 = scmp.eq.s32.totalorder %s23, 0
      %p168 = por %p166, %p167
      %p169 = scmp.ne.s32.totalorder %s155, %s156
      %p170 = scmp.eq.s32.totalorder %s24, 8
      %p171 = por %p169, %p170
      %p173 = scmp.ne.s32.totalorder %s156, %s172
      %p174 = scmp.eq.s32.totalorder %s24, 0
      %p175 = por %p173, %p174
      %p176 = scmp.le.s32.totalorder 1, %s18
      %p177 = scmp.lt.s32.totalorder %s18, 10
      %p178 = pnand %p176, %p177
      %p179 = pneg %p178
      // Predicated region
      $region9: #{tpu_custom_call.1} parent=5 // pred_check
        _
      $region10: #{tpu_custom_call.1} parent=5 // pred_check_branch
        %181 = sbr.rel (%p178) target = $region12
      $region11: #{tpu_custom_call.1} parent=5 // pred_region
        %s182 = ssub.s32 %s18, 1
        // Predicated region
        $region13: #{tpu_custom_call.1} parent=11 // pred_check
          %p183 = pneg %p79
        $region14: #{tpu_custom_call.1} parent=11 // pred_check_branch
          %185 = sbr.rel (%p183) target = $region16
        $region15: #{tpu_custom_call.1} parent=11 // pred_region
          %s187 = ssub.s32 8192, 8192
          %188 = vsyncadd [#allocation8], %s187
          %s189 = sshll.u32 [#allocation7], 4
          %s190 = int_to_ptr.vmem [resolvable:$true] %s189
          %195 = dma.hbm_to_vmem [thread:$0]  %s1, 8192, %s190, [#allocation8], 256, 256, 16
        $region16: #{tpu_custom_call.1} parent=11 // pred_fallthru
          _
        // Predicated region
        $region17: #{tpu_custom_call.1} parent=11 // pred_check
          %p196 = pneg %p100
        $region18: #{tpu_custom_call.1} parent=11 // pred_check_branch
          %198 = sbr.rel (%p196) target = $region20
        $region19: #{tpu_custom_call.1} parent=11 // pred_region
          _
        $region20: #{tpu_custom_call.1} parent=11 // pred_fallthru
          _
        // Predicated region
        $region21: #{tpu_custom_call.1} parent=11 // pred_check
          %p199 = pneg %p121
        $region22: #{tpu_custom_call.1} parent=11 // pred_check_branch
          %201 = sbr.rel (%p199) target = $region24
        $region23: #{tpu_custom_call.1} parent=11 // pred_region
          _
        $region24: #{tpu_custom_call.1} parent=11 // pred_fallthru
          _
        // Predicated region
        $region25: #{tpu_custom_call.1} parent=11 // pred_check
          %p202 = pneg %p142
        $region26: #{tpu_custom_call.1} parent=11 // pred_check_branch
          %204 = sbr.rel (%p202) target = $region28
        $region27: #{tpu_custom_call.1} parent=11 // pred_region
          _
        $region28: #{tpu_custom_call.1} parent=11 // pred_fallthru
          _
      $region12: #{tpu_custom_call.1} parent=5 // pred_fallthru
        _
      %p205 = scmp.lt.s32.totalorder %s18, 9
      // Predicated region
      $region29: #{tpu_custom_call.1} parent=5 // pred_check
        %p206 = pneg %p205
      $region30: #{tpu_custom_call.1} parent=5 // pred_check_branch
        %208 = sbr.rel (%p206) target = $region32
      $region31: #{tpu_custom_call.1} parent=5 // pred_region
        // Predicated region
        $region33: #{tpu_custom_call.1} parent=31 // pred_check
          %p209 = pneg %p52
        $region34: #{tpu_custom_call.1} parent=31 // pred_check_branch
          %211 = sbr.rel (%p209) target = $region36
        $region35: #{tpu_custom_call.1} parent=31 // pred_region
          %s212 = sand.u32 %s42, 1
          %s213 = scalar_lea.sflag [#allocation5], %s212
          %s214 = sand.u32 %s42, 1
          %s215 = smul.addr %s214, 32
          %s216 = scalar_lea.vmem [#allocation4], %s215
          %s217 = smul.u32 2, %s26
          %s219 = ssub.s32 512, 512
          %220 = vsyncadd %s213, %s219
          %s221 = smul.addr %s217, 2
          %s222 = smul.addr %s25, 12
          %s223 = sadd.s32 %s221, %s222
          %s224 = smul.addr %s223, 128
          %s225 = scalar_lea.hbm %s0, %s224
          %s226 = sshll.u32 %s216, 4
          %s227 = int_to_ptr.vmem [resolvable:$true] %s226
          %232 = dma.hbm_to_vmem [thread:$0]  %s225, 512, %s227, %s213, 256, 256, 16
        $region36: #{tpu_custom_call.1} parent=31 // pred_fallthru
          _
      $region32: #{tpu_custom_call.1} parent=5 // pred_fallthru
        _
      %p233 = scmp.le.s32.totalorder 1, %s18
      %p234 = scmp.lt.s32.totalorder %s18, 10
      %p235 = pnand %p233, %p234
      %p236 = pneg %p235
      // Predicated region
      $region37: #{tpu_custom_call.1} parent=5 // pred_check
        _
      $region38: #{tpu_custom_call.1} parent=5 // pred_check_branch
        %238 = sbr.rel (%p235) target = $region40
      $region39: #{tpu_custom_call.1} parent=5 // pred_region
        %s239 = ssub.s32 %s18, 1
        %s240 = sand.u32 %s45, 1
        %s241 = scalar_lea.sflag [#allocation5], %s240
        %s242 = sand.u32 %s45, 1
        %s243 = smul.addr %s242, 32
        %s244 = scalar_lea.vmem [#allocation4], %s243
        // Predicated region
        $region41: #{tpu_custom_call.1} parent=39 // pred_check
          %p245 = pneg %p58
        $region42: #{tpu_custom_call.1} parent=39 // pred_check_branch
          %247 = sbr.rel (%p245) target = $region44
        $region43: #{tpu_custom_call.1} parent=39 // pred_region
          %248 = dma.done %s241, 512
        $region44: #{tpu_custom_call.1} parent=39 // pred_fallthru
          _
        // Predicated region
        $region45: #{tpu_custom_call.1} parent=39 // pred_check
          %p249 = pneg %p79
        $region46: #{tpu_custom_call.1} parent=39 // pred_check_branch
          %251 = sbr.rel (%p249) target = $region48
        $region47: #{tpu_custom_call.1} parent=39 // pred_region
          %252 = dma.done [#allocation8], 8192
        $region48: #{tpu_custom_call.1} parent=39 // pred_fallthru
          _
        %s253 = sand.u32 %s45, 1
        %s254 = scalar_lea.sflag [#allocation5], %s253
        %s255 = sand.u32 %s45, 1
        %s256 = smul.addr %s255, 32
        %s257 = scalar_lea.vmem [#allocation4], %s256
        %p258 = pneg %p58
        %p259 = pneg %p55
        %p260 = pneg %p79
        %p261 = pneg %p76
        %p262 = pneg %p100
        %p263 = pneg %p97
        %p264 = pneg %p121
        %p265 = pneg %p118
        %p266 = pneg %p142
        %p267 = pneg %p139
        %p268 = pneg %p168
        %p269 = pneg %p165
        %s270 = sand.u32 %s155, 1
        %s271 = scalar_lea.sflag [#allocation6], %s270
        %s272 = sand.u32 %s155, 1
        %s273 = scalar_lea.vmem [#allocation9], %s272
        %s274 = smul.u32 2, %s28
        %p276 = scmp.eq.s32.totalorder %s28, 0
        // Predicated region
        $region49: #{tpu_custom_call.1} parent=39 // pred_check
          %p277 = pneg %p276
        $region50: #{tpu_custom_call.1} parent=39 // pred_check_branch
          %279 = sbr.rel (%p277) target = $region52
        $region51: #{tpu_custom_call.1} parent=39 // pred_region
          %vm280 = vcmask 0
          %281 = vst.msk [vmem:[#allocation2] sm:$0x1] %vm280, inf
          %vm282 = vcmask 24576
          %283 = vst.msk [vmem:[#allocation3] sm:$0x1] %vm282, 0.0
        $region52: #{tpu_custom_call.1} parent=39 // pred_fallthru
          _
        %v284 = vld [vmem:[%s244] sm:$0xff]
        %v285 = vld [vmem:[%s244 + $0x8] sm:$0xff]
        %v286 = vld [vmem:[%s244 + $0x10] sm:$0xff]
        %v287 = vld [vmem:[%s244 + $0x18] sm:$0xff]
        %v288 = vpack.c.bf16 %v286, %v284
        %v289 = vpack.c.bf16 %v287, %v285
        %v290 = vld [vmem:[#allocation7] sm:$0xff]
        %v291 = vld [vmem:[#allocation7 + $0x8] sm:$0xff]
        %v292 = vld [vmem:[#allocation7 + $0x10] sm:$0xff]
        %v293 = vld [vmem:[#allocation7 + $0x18] sm:$0xff]
        %v294 = vld [vmem:[#allocation7 + $0x20] sm:$0xff]
        %v295 = vld [vmem:[#allocation7 + $0x28] sm:$0xff]
        %v296 = vld [vmem:[#allocation7 + $0x30] sm:$0xff]
        %v297 = vld [vmem:[#allocation7 + $0x38] sm:$0xff]
        %v298 = vld [vmem:[#allocation7 + $0x40] sm:$0xff]
        %v299 = vld [vmem:[#allocation7 + $0x48] sm:$0xff]
        %v300 = vld [vmem:[#allocation7 + $0x50] sm:$0xff]
        %v301 = vld [vmem:[#allocation7 + $0x58] sm:$0xff]
        %v302 = vld [vmem:[#allocation7 + $0x60] sm:$0xff]
        %v303 = vld [vmem:[#allocation7 + $0x68] sm:$0xff]
        %v304 = vld [vmem:[#allocation7 + $0x70] sm:$0xff]
        %v305 = vld [vmem:[#allocation7 + $0x78] sm:$0xff]
        %v306 = vld [vmem:[#allocation7 + $0x80] sm:$0xff]
        %v307 = vld [vmem:[#allocation7 + $0x88] sm:$0xff]
        %v308 = vld [vmem:[#allocation7 + $0x90] sm:$0xff]
        %v309 = vld [vmem:[#allocation7 + $0x98] sm:$0xff]
        %v310 = vld [vmem:[#allocation7 + $0xa0] sm:$0xff]
        %v311 = vld [vmem:[#allocation7 + $0xa8] sm:$0xff]
        %v312 = vld [vmem:[#allocation7 + $0xb0] sm:$0xff]
        %v313 = vld [vmem:[#allocation7 + $0xb8] sm:$0xff]
        %v314 = vld [vmem:[#allocation7 + $0xc0] sm:$0xff]
        %v315 = vld [vmem:[#allocation7 + $0xc8] sm:$0xff]
        %v316 = vld [vmem:[#allocation7 + $0xd0] sm:$0xff]
        %v317 = vld [vmem:[#allocation7 + $0xd8] sm:$0xff]
        %v318 = vld [vmem:[#allocation7 + $0xe0] sm:$0xff]
        %v319 = vld [vmem:[#allocation7 + $0xe8] sm:$0xff]
        %v320 = vld [vmem:[#allocation7 + $0xf0] sm:$0xff]
        %v321 = vld [vmem:[#allocation7 + $0xf8] sm:$0xff]
        %v322 = vld [vmem:[#allocation7 + $0x100] sm:$0xff]
        %v323 = vld [vmem:[#allocation7 + $0x108] sm:$0xff]
        %v324 = vld [vmem:[#allocation7 + $0x110] sm:$0xff]
        %v325 = vld [vmem:[#allocation7 + $0x118] sm:$0xff]
        %v326 = vld [vmem:[#allocation7 + $0x120] sm:$0xff]
        %v327 = vld [vmem:[#allocation7 + $0x128] sm:$0xff]
        %v328 = vld [vmem:[#allocation7 + $0x130] sm:$0xff]
        %v329 = vld [vmem:[#allocation7 + $0x138] sm:$0xff]
        %v330 = vld [vmem:[#allocation7 + $0x140] sm:$0xff]
        %v331 = vld [vmem:[#allocation7 + $0x148] sm:$0xff]
        %v332 = vld [vmem:[#allocation7 + $0x150] sm:$0xff]
        %v333 = vld [vmem:[#allocation7 + $0x158] sm:$0xff]
        %v334 = vld [vmem:[#allocation7 + $0x160] sm:$0xff]
        %v335 = vld [vmem:[#allocation7 + $0x168] sm:$0xff]
        %v336 = vld [vmem:[#allocation7 + $0x170] sm:$0xff]
        %v337 = vld [vmem:[#allocation7 + $0x178] sm:$0xff]
        %v338 = vld [vmem:[#allocation7 + $0x180] sm:$0xff]
        %v339 = vld [vmem:[#allocation7 + $0x188] sm:$0xff]
        %v340 = vld [vmem:[#allocation7 + $0x190] sm:$0xff]
        %v341 = vld [vmem:[#allocation7 + $0x198] sm:$0xff]
        %v342 = vld [vmem:[#allocation7 + $0x1a0] sm:$0xff]
        %v343 = vld [vmem:[#allocation7 + $0x1a8] sm:$0xff]
        %v344 = vld [vmem:[#allocation7 + $0x1b0] sm:$0xff]
        %v345 = vld [vmem:[#allocation7 + $0x1b8] sm:$0xff]
        %v346 = vld [vmem:[#allocation7 + $0x1c0] sm:$0xff]
        %v347 = vld [vmem:[#allocation7 + $0x1c8] sm:$0xff]
        %v348 = vld [vmem:[#allocation7 + $0x1d0] sm:$0xff]
        %v349 = vld [vmem:[#allocation7 + $0x1d8] sm:$0xff]
        %v350 = vld [vmem:[#allocation7 + $0x1e0] sm:$0xff]
        %v351 = vld [vmem:[#allocation7 + $0x1e8] sm:$0xff]
        %v352 = vld [vmem:[#allocation7 + $0x1f0] sm:$0xff]
        %v353 = vld [vmem:[#allocation7 + $0x1f8] sm:$0xff]
        %v354 = vld [vmem:[%s2] sm:$0xf]
        %v356 = vlaneseq
        %v357 = vshrl.u32 %v356, 7
        %v358 = vsub.s32 0, %v357
        %v359 = vrot.slane %v354, %v358
        %v360 = vlaneseq
        %v361 = vshrl.u32 %v360, 7
        %v362 = vsub.s32 1, %v361
        %v363 = vrot.slane %v354, %v362
        %v364 = vlaneseq
        %v365 = vshrl.u32 %v364, 7
        %v366 = vsub.s32 2, %v365
        %v367 = vrot.slane %v354, %v366
        %v368 = vlaneseq
        %v369 = vshrl.u32 %v368, 7
        %v370 = vsub.s32 3, %v369
        %v371 = vrot.slane %v354, %v370
        %v440 = vunpack.c.l.b16 %v290
        %v441 = vunpack.c.h.b16 %v290
        %v442 = vunpack.c.l.b16 %v291
        %v443 = vunpack.c.h.b16 %v291
        %v444 = vunpack.c.l.b16 %v292
        %v445 = vunpack.c.h.b16 %v292
        %v446 = vunpack.c.l.b16 %v293
        %v447 = vunpack.c.h.b16 %v293
        %v448 = vunpack.c.l.b16 %v294
        %v449 = vunpack.c.h.b16 %v294
        %v450 = vunpack.c.l.b16 %v295
        %v451 = vunpack.c.h.b16 %v295
        %v452 = vunpack.c.l.b16 %v296
        %v453 = vunpack.c.h.b16 %v296
        %v454 = vunpack.c.l.b16 %v297
        %v455 = vunpack.c.h.b16 %v297
        %v456 = vunpack.c.l.b16 %v298
        %v457 = vunpack.c.h.b16 %v298
        %v458 = vunpack.c.l.b16 %v299
        %v459 = vunpack.c.h.b16 %v299
        %v460 = vunpack.c.l.b16 %v300
        %v461 = vunpack.c.h.b16 %v300
        %v462 = vunpack.c.l.b16 %v301
        %v463 = vunpack.c.h.b16 %v301
        %v464 = vunpack.c.l.b16 %v302
        %v465 = vunpack.c.h.b16 %v302
        %v466 = vunpack.c.l.b16 %v303
        %v467 = vunpack.c.h.b16 %v303
        %v468 = vunpack.c.l.b16 %v304
        %v469 = vunpack.c.h.b16 %v304
        %v470 = vunpack.c.l.b16 %v305
        %v471 = vunpack.c.h.b16 %v305
        %v472 = vunpack.c.l.b16 %v306
        %v473 = vunpack.c.h.b16 %v306
        %v474 = vunpack.c.l.b16 %v307
        %v475 = vunpack.c.h.b16 %v307
        %v476 = vunpack.c.l.b16 %v308
        %v477 = vunpack.c.h.b16 %v308
        %v478 = vunpack.c.l.b16 %v309
        %v479 = vunpack.c.h.b16 %v309
        %v480 = vunpack.c.l.b16 %v310
        %v481 = vunpack.c.h.b16 %v310
        %v482 = vunpack.c.l.b16 %v311
        %v483 = vunpack.c.h.b16 %v311
        %v484 = vunpack.c.l.b16 %v312
        %v485 = vunpack.c.h.b16 %v312
        %v486 = vunpack.c.l.b16 %v313
        %v487 = vunpack.c.h.b16 %v313
        %v488 = vunpack.c.l.b16 %v314
        %v489 = vunpack.c.h.b16 %v314
        %v490 = vunpack.c.l.b16 %v315
        %v491 = vunpack.c.h.b16 %v315
        %v492 = vunpack.c.l.b16 %v316
        %v493 = vunpack.c.h.b16 %v316
        %v494 = vunpack.c.l.b16 %v317
        %v495 = vunpack.c.h.b16 %v317
        %v496 = vunpack.c.l.b16 %v318
        %v497 = vunpack.c.h.b16 %v318
        %v498 = vunpack.c.l.b16 %v319
        %v499 = vunpack.c.h.b16 %v319
        %v500 = vunpack.c.l.b16 %v320
        %v501 = vunpack.c.h.b16 %v320
        %v502 = vunpack.c.l.b16 %v321
        %v503 = vunpack.c.h.b16 %v321
        %v504 = vunpack.c.l.b16 %v322
        %v505 = vunpack.c.h.b16 %v322
        %v506 = vunpack.c.l.b16 %v323
        %v507 = vunpack.c.h.b16 %v323
        %v508 = vunpack.c.l.b16 %v324
        %v509 = vunpack.c.h.b16 %v324
        %v510 = vunpack.c.l.b16 %v325
        %v511 = vunpack.c.h.b16 %v325
        %v512 = vunpack.c.l.b16 %v326
        %v513 = vunpack.c.h.b16 %v326
        %v514 = vunpack.c.l.b16 %v327
        %v515 = vunpack.c.h.b16 %v327
        %v516 = vunpack.c.l.b16 %v328
        %v517 = vunpack.c.h.b16 %v328
        %v518 = vunpack.c.l.b16 %v329
        %v519 = vunpack.c.h.b16 %v329
        %v520 = vunpack.c.l.b16 %v330
        %v521 = vunpack.c.h.b16 %v330
        %v522 = vunpack.c.l.b16 %v331
        %v523 = vunpack.c.h.b16 %v331
        %v524 = vunpack.c.l.b16 %v332
        %v525 = vunpack.c.h.b16 %v332
        %v526 = vunpack.c.l.b16 %v333
        %v527 = vunpack.c.h.b16 %v333
        %v528 = vunpack.c.l.b16 %v334
        %v529 = vunpack.c.h.b16 %v334
        %v530 = vunpack.c.l.b16 %v335
        %v531 = vunpack.c.h.b16 %v335
        %v532 = vunpack.c.l.b16 %v336
        %v533 = vunpack.c.h.b16 %v336
        %v534 = vunpack.c.l.b16 %v337
        %v535 = vunpack.c.h.b16 %v337
        %v536 = vunpack.c.l.b16 %v338
        %v537 = vunpack.c.h.b16 %v338
        %v538 = vunpack.c.l.b16 %v339
        %v539 = vunpack.c.h.b16 %v339
        %v540 = vunpack.c.l.b16 %v340
        %v541 = vunpack.c.h.b16 %v340
        %v542 = vunpack.c.l.b16 %v341
        %v543 = vunpack.c.h.b16 %v341
        %v544 = vunpack.c.l.b16 %v342
        %v545 = vunpack.c.h.b16 %v342
        %v546 = vunpack.c.l.b16 %v343
        %v547 = vunpack.c.h.b16 %v343
        %v548 = vunpack.c.l.b16 %v344
        %v549 = vunpack.c.h.b16 %v344
        %v550 = vunpack.c.l.b16 %v345
        %v551 = vunpack.c.h.b16 %v345
        %v552 = vunpack.c.l.b16 %v346
        %v553 = vunpack.c.h.b16 %v346
        %v554 = vunpack.c.l.b16 %v347
        %v555 = vunpack.c.h.b16 %v347
        %v556 = vunpack.c.l.b16 %v348
        %v557 = vunpack.c.h.b16 %v348
        %v558 = vunpack.c.l.b16 %v349
        %v559 = vunpack.c.h.b16 %v349
        %v560 = vunpack.c.l.b16 %v350
        %v561 = vunpack.c.h.b16 %v350
        %v562 = vunpack.c.l.b16 %v351
        %v563 = vunpack.c.h.b16 %v351
        %v564 = vunpack.c.l.b16 %v352
        %v565 = vunpack.c.h.b16 %v352
        %v566 = vunpack.c.l.b16 %v353
        %v567 = vunpack.c.h.b16 %v353
        %v568 = vpack.c.b16 %v444, %v440
        %v569 = vpack.c.b16 %v445, %v441
        %v570 = vpack.c.b16 %v446, %v442
        %v571 = vpack.c.b16 %v447, %v443
        %v572 = vpack.c.b16 %v452, %v448
        %v573 = vpack.c.b16 %v453, %v449
        %v574 = vpack.c.b16 %v454, %v450
        %v575 = vpack.c.b16 %v455, %v451
        %v576 = vpack.c.b16 %v460, %v456
        %v577 = vpack.c.b16 %v461, %v457
        %v578 = vpack.c.b16 %v462, %v458
        %v579 = vpack.c.b16 %v463, %v459
        %v580 = vpack.c.b16 %v468, %v464
        %v581 = vpack.c.b16 %v469, %v465
        %v582 = vpack.c.b16 %v470, %v466
        %v583 = vpack.c.b16 %v471, %v467
        %v584 = vpack.c.b16 %v476, %v472
        %v585 = vpack.c.b16 %v477, %v473
        %v586 = vpack.c.b16 %v478, %v474
        %v587 = vpack.c.b16 %v479, %v475
        %v588 = vpack.c.b16 %v484, %v480
        %v589 = vpack.c.b16 %v485, %v481
        %v590 = vpack.c.b16 %v486, %v482
        %v591 = vpack.c.b16 %v487, %v483
        %v592 = vpack.c.b16 %v492, %v488
        %v593 = vpack.c.b16 %v493, %v489
        %v594 = vpack.c.b16 %v494, %v490
        %v595 = vpack.c.b16 %v495, %v491
        %v596 = vpack.c.b16 %v500, %v496
        %v597 = vpack.c.b16 %v501, %v497
        %v598 = vpack.c.b16 %v502, %v498
        %v599 = vpack.c.b16 %v503, %v499
        %v600 = vpack.c.b16 %v508, %v504
        %v601 = vpack.c.b16 %v509, %v505
        %v602 = vpack.c.b16 %v510, %v506
        %v603 = vpack.c.b16 %v511, %v507
        %v604 = vpack.c.b16 %v516, %v512
        %v605 = vpack.c.b16 %v517, %v513
        %v606 = vpack.c.b16 %v518, %v514
        %v607 = vpack.c.b16 %v519, %v515
        %v608 = vpack.c.b16 %v524, %v520
        %v609 = vpack.c.b16 %v525, %v521
        %v610 = vpack.c.b16 %v526, %v522
        %v611 = vpack.c.b16 %v527, %v523
        %v612 = vpack.c.b16 %v532, %v528
        %v613 = vpack.c.b16 %v533, %v529
        %v614 = vpack.c.b16 %v534, %v530
        %v615 = vpack.c.b16 %v535, %v531
        %v616 = vpack.c.b16 %v540, %v536
        %v617 = vpack.c.b16 %v541, %v537
        %v618 = vpack.c.b16 %v542, %v538
        %v619 = vpack.c.b16 %v543, %v539
        %v620 = vpack.c.b16 %v548, %v544
        %v621 = vpack.c.b16 %v549, %v545
        %v622 = vpack.c.b16 %v550, %v546
        %v623 = vpack.c.b16 %v551, %v547
        %v624 = vpack.c.b16 %v556, %v552
        %v625 = vpack.c.b16 %v557, %v553
        %v626 = vpack.c.b16 %v558, %v554
        %v627 = vpack.c.b16 %v559, %v555
        %v628 = vpack.c.b16 %v564, %v560
        %v629 = vpack.c.b16 %v565, %v561
        %v630 = vpack.c.b16 %v566, %v562
        %v631 = vpack.c.b16 %v567, %v563
        %696 = vmatprep.subr.bf16.mxu0 %v569
        %697 = vmatpush1.bf16.msra.mxu0 %v568
        %698 = vmatprep.subr.bf16.mxu0 %v573
        %699 = vmatpush1.bf16.msra.mxu0 %v572
        %700 = vmatprep.subr.bf16.mxu0 %v577
        %701 = vmatpush1.bf16.msra.mxu0 %v576
        %702 = vmatprep.subr.bf16.mxu0 %v581
        %703 = vmatpush1.bf16.msra.mxu0 %v580
        %704 = vmatprep.subr.bf16.mxu0 %v585
        %705 = vmatpush1.bf16.msra.mxu0 %v584
        %706 = vmatprep.subr.bf16.mxu0 %v589
        %707 = vmatpush1.bf16.msra.mxu0 %v588
        %708 = vmatprep.subr.bf16.mxu0 %v593
        %709 = vmatpush1.bf16.msra.mxu0 %v592
        %710 = vmatprep.subr.bf16.mxu0 %v597
        %711 = vmatpush1.bf16.msra.mxu0 %v596
        %712 = vmatprep.subr.bf16.mxu0 %v601
        %713 = vmatpush1.bf16.msra.mxu0 %v600
        %714 = vmatprep.subr.bf16.mxu0 %v605
        %715 = vmatpush1.bf16.msra.mxu0 %v604
        %716 = vmatprep.subr.bf16.mxu0 %v609
        %717 = vmatpush1.bf16.msra.mxu0 %v608
        %718 = vmatprep.subr.bf16.mxu0 %v613
        %719 = vmatpush1.bf16.msra.mxu0 %v612
        %720 = vmatprep.subr.bf16.mxu0 %v617
        %721 = vmatpush1.bf16.msra.mxu0 %v616
        %722 = vmatprep.subr.bf16.mxu0 %v621
        %723 = vmatpush1.bf16.msra.mxu0 %v620
        %724 = vmatprep.subr.bf16.mxu0 %v625
        %725 = vmatpush1.bf16.msra.mxu0 %v624
        %726 = vmatprep.subr.bf16.mxu0 %v629
        %727 = vmatpush1.bf16.msra.mxu0 %v628
        %728 = vmatprep.mubr.bf16.mxu0 %v289
        %729 = vmatmul.mubr.bf16.gmra.mrb[0].mxu0 %v288
        %v730 = vpop.f32.mrb[0].mxu0
        %v731 = vadd.f32 %v359, %v730
        %v732 = vpop.f32.mrb[0].mxu0
        %v733 = vadd.f32 %v363, %v732
        %v734 = vpop.f32.mrb[0].mxu0
        %v735 = vadd.f32 %v359, %v734
        %v736 = vpop.f32.mrb[0].mxu0
        %v737 = vadd.f32 %v363, %v736
        %738 = vdwg.mxu0
        %739 = vmatprep.subr.bf16.mxu0 %v571
        %740 = vmatpush1.bf16.msra.mxu0 %v570
        %741 = vmatprep.subr.bf16.mxu0 %v575
        %742 = vmatpush1.bf16.msra.mxu0 %v574
        %743 = vmatprep.subr.bf16.mxu0 %v579
        %744 = vmatpush1.bf16.msra.mxu0 %v578
        %745 = vmatprep.subr.bf16.mxu0 %v583
        %746 = vmatpush1.bf16.msra.mxu0 %v582
        %747 = vmatprep.subr.bf16.mxu0 %v587
        %748 = vmatpush1.bf16.msra.mxu0 %v586
        %749 = vmatprep.subr.bf16.mxu0 %v591
        %750 = vmatpush1.bf16.msra.mxu0 %v590
        %751 = vmatprep.subr.bf16.mxu0 %v595
        %752 = vmatpush1.bf16.msra.mxu0 %v594
        %753 = vmatprep.subr.bf16.mxu0 %v599
        %754 = vmatpush1.bf16.msra.mxu0 %v598
        %755 = vmatprep.subr.bf16.mxu0 %v603
        %756 = vmatpush1.bf16.msra.mxu0 %v602
        %757 = vmatprep.subr.bf16.mxu0 %v607
        %758 = vmatpush1.bf16.msra.mxu0 %v606
        %759 = vmatprep.subr.bf16.mxu0 %v611
        %760 = vmatpush1.bf16.msra.mxu0 %v610
        %761 = vmatprep.subr.bf16.mxu0 %v615
        %762 = vmatpush1.bf16.msra.mxu0 %v614
        %763 = vmatprep.subr.bf16.mxu0 %v619
        %764 = vmatpush1.bf16.msra.mxu0 %v618
        %765 = vmatprep.subr.bf16.mxu0 %v623
        %766 = vmatpush1.bf16.msra.mxu0 %v622
        %767 = vmatprep.subr.bf16.mxu0 %v627
        %768 = vmatpush1.bf16.msra.mxu0 %v626
        %769 = vmatprep.subr.bf16.mxu0 %v631
        %770 = vmatpush1.bf16.msra.mxu0 %v630
        %771 = vmatprep.mubr.bf16.mxu0 %v289
        %772 = vmatmul.mubr.bf16.gmra.mrb[0].mxu0 %v288
        %v773 = vpop.f32.mrb[0].mxu0
        %v774 = vadd.f32 %v367, %v773
        %v775 = vpop.f32.mrb[0].mxu0
        %v776 = vadd.f32 %v371, %v775
        %v777 = vpop.f32.mrb[0].mxu0
        %v778 = vadd.f32 %v367, %v777
        %v779 = vpop.f32.mrb[0].mxu0
        %v780 = vadd.f32 %v371, %v779
        %781 = vdwg.mxu0
        %v782 = vmax.f32 %v731, 0.0
        %v783 = vmax.f32 %v733, 0.0
        %v784 = vmax.f32 %v774, 0.0
        %v785 = vmax.f32 %v776, 0.0
        %v786 = vmax.f32 %v735, 0.0
        %v787 = vmax.f32 %v737, 0.0
        %v788 = vmax.f32 %v778, 0.0
        %v789 = vmax.f32 %v780, 0.0
        %v790 = vpack.c.bf16 %v786, %v782
        %v791 = vpack.c.bf16 %v787, %v783
        %v792 = vpack.c.bf16 %v788, %v784
        %v793 = vpack.c.bf16 %v789, %v785
        %v794 = vld [vmem:[%s3] sm:$0xf]
        %v795 = vld [vmem:[%s3 + $0x4] sm:$0xf]
        %v796 = vld [vmem:[%s3 + $0x8] sm:$0xf]
        %v797 = vld [vmem:[%s3 + $0xc] sm:$0xf]
        %v798 = vld [vmem:[%s3 + $0x10] sm:$0xf]
        %v799 = vld [vmem:[%s3 + $0x14] sm:$0xf]
        %v800 = vld [vmem:[%s3 + $0x18] sm:$0xf]
        %v801 = vld [vmem:[%s3 + $0x1c] sm:$0xf]
        %v802 = vld [vmem:[%s3 + $0x20] sm:$0xf]
        %v803 = vld [vmem:[%s3 + $0x24] sm:$0xf]
        %v804 = vld [vmem:[%s3 + $0x28] sm:$0xf]
        %v805 = vld [vmem:[%s3 + $0x2c] sm:$0xf]
        %v806 = vld [vmem:[%s3 + $0x30] sm:$0xf]
        %v807 = vld [vmem:[%s3 + $0x34] sm:$0xf]
        %v808 = vld [vmem:[%s3 + $0x38] sm:$0xf]
        %v809 = vld [vmem:[%s3 + $0x3c] sm:$0xf]
        %v810 = vld [vmem:[%s3 + $0x40] sm:$0xf]
        %v811 = vld [vmem:[%s3 + $0x44] sm:$0xf]
        %v812 = vld [vmem:[%s3 + $0x48] sm:$0xf]
        %v813 = vld [vmem:[%s3 + $0x4c] sm:$0xf]
        %v814 = vld [vmem:[%s3 + $0x50] sm:$0xf]
        %v815 = vld [vmem:[%s3 + $0x54] sm:$0xf]
        %v816 = vld [vmem:[%s3 + $0x58] sm:$0xf]
        %v817 = vld [vmem:[%s3 + $0x5c] sm:$0xf]
        %v818 = vld [vmem:[%s3 + $0x60] sm:$0xf]
        %v819 = vld [vmem:[%s3 + $0x64] sm:$0xf]
        %v820 = vld [vmem:[%s3 + $0x68] sm:$0xf]
        %v821 = vld [vmem:[%s3 + $0x6c] sm:$0xf]
        %v822 = vld [vmem:[%s3 + $0x70] sm:$0xf]
        %v823 = vld [vmem:[%s3 + $0x74] sm:$0xf]
        %v824 = vld [vmem:[%s3 + $0x78] sm:$0xf]
        %v825 = vld [vmem:[%s3 + $0x7c] sm:$0xf]
        %v826 = vld [vmem:[%s3 + $0x80] sm:$0xf]
        %v827 = vld [vmem:[%s3 + $0x84] sm:$0xf]
        %v828 = vld [vmem:[%s3 + $0x88] sm:$0xf]
        %v829 = vld [vmem:[%s3 + $0x8c] sm:$0xf]
        %v830 = vld [vmem:[%s3 + $0x90] sm:$0xf]
        %v831 = vld [vmem:[%s3 + $0x94] sm:$0xf]
        %v832 = vld [vmem:[%s3 + $0x98] sm:$0xf]
        %v833 = vld [vmem:[%s3 + $0x9c] sm:$0xf]
        %v834 = vld [vmem:[%s3 + $0xa0] sm:$0xf]
        %v835 = vld [vmem:[%s3 + $0xa4] sm:$0xf]
        %v836 = vld [vmem:[%s3 + $0xa8] sm:$0xf]
        %v837 = vld [vmem:[%s3 + $0xac] sm:$0xf]
        %v838 = vld [vmem:[%s3 + $0xb0] sm:$0xf]
        %v839 = vld [vmem:[%s3 + $0xb4] sm:$0xf]
        %v840 = vld [vmem:[%s3 + $0xb8] sm:$0xf]
        %v841 = vld [vmem:[%s3 + $0xbc] sm:$0xf]
        %v842 = vld [vmem:[%s3 + $0xc0] sm:$0xf]
        %v843 = vld [vmem:[%s3 + $0xc4] sm:$0xf]
        %v844 = vld [vmem:[%s3 + $0xc8] sm:$0xf]
        %v845 = vld [vmem:[%s3 + $0xcc] sm:$0xf]
        %v846 = vld [vmem:[%s3 + $0xd0] sm:$0xf]
        %v847 = vld [vmem:[%s3 + $0xd4] sm:$0xf]
        %v848 = vld [vmem:[%s3 + $0xd8] sm:$0xf]
        %v849 = vld [vmem:[%s3 + $0xdc] sm:$0xf]
        %v850 = vld [vmem:[%s3 + $0xe0] sm:$0xf]
        %v851 = vld [vmem:[%s3 + $0xe4] sm:$0xf]
        %v852 = vld [vmem:[%s3 + $0xe8] sm:$0xf]
        %v853 = vld [vmem:[%s3 + $0xec] sm:$0xf]
        %v854 = vld [vmem:[%s3 + $0xf0] sm:$0xf]
        %v855 = vld [vmem:[%s3 + $0xf4] sm:$0xf]
        %v856 = vld [vmem:[%s3 + $0xf8] sm:$0xf]
        %v857 = vld [vmem:[%s3 + $0xfc] sm:$0xf]
        %v858 = vld [vmem:[%s4] sm:$0x1]
        %v860 = vlaneseq
        %v861 = vshrl.u32 %v860, 7
        %v862 = vsub.s32 0, %v861
        %v863 = vrot.slane %v858, %v862
        %v929 = vunpack.c.l.b16 %v794
        %v930 = vunpack.c.l.b16 %v795
        %v931 = vunpack.c.l.b16 %v796
        %v932 = vunpack.c.l.b16 %v797
        %v933 = vunpack.c.l.b16 %v798
        %v934 = vunpack.c.l.b16 %v799
        %v935 = vunpack.c.l.b16 %v800
        %v936 = vunpack.c.l.b16 %v801
        %v937 = vunpack.c.l.b16 %v802
        %v938 = vunpack.c.l.b16 %v803
        %v939 = vunpack.c.l.b16 %v804
        %v940 = vunpack.c.l.b16 %v805
        %v941 = vunpack.c.l.b16 %v806
        %v942 = vunpack.c.l.b16 %v807
        %v943 = vunpack.c.l.b16 %v808
        %v944 = vunpack.c.l.b16 %v809
        %v945 = vunpack.c.l.b16 %v810
        %v946 = vunpack.c.l.b16 %v811
        %v947 = vunpack.c.l.b16 %v812
        %v948 = vunpack.c.l.b16 %v813
        %v949 = vunpack.c.l.b16 %v814
        %v950 = vunpack.c.l.b16 %v815
        %v951 = vunpack.c.l.b16 %v816
        %v952 = vunpack.c.l.b16 %v817
        %v953 = vunpack.c.l.b16 %v818
        %v954 = vunpack.c.l.b16 %v819
        %v955 = vunpack.c.l.b16 %v820
        %v956 = vunpack.c.l.b16 %v821
        %v957 = vunpack.c.l.b16 %v822
        %v958 = vunpack.c.l.b16 %v823
        %v959 = vunpack.c.l.b16 %v824
        %v960 = vunpack.c.l.b16 %v825
        %v961 = vunpack.c.l.b16 %v826
        %v962 = vunpack.c.l.b16 %v827
        %v963 = vunpack.c.l.b16 %v828
        %v964 = vunpack.c.l.b16 %v829
        %v965 = vunpack.c.l.b16 %v830
        %v966 = vunpack.c.l.b16 %v831
        %v967 = vunpack.c.l.b16 %v832
        %v968 = vunpack.c.l.b16 %v833
        %v969 = vunpack.c.l.b16 %v834
        %v970 = vunpack.c.l.b16 %v835
        %v971 = vunpack.c.l.b16 %v836
        %v972 = vunpack.c.l.b16 %v837
        %v973 = vunpack.c.l.b16 %v838
        %v974 = vunpack.c.l.b16 %v839
        %v975 = vunpack.c.l.b16 %v840
        %v976 = vunpack.c.l.b16 %v841
        %v977 = vunpack.c.l.b16 %v842
        %v978 = vunpack.c.l.b16 %v843
        %v979 = vunpack.c.l.b16 %v844
        %v980 = vunpack.c.l.b16 %v845
        %v981 = vunpack.c.l.b16 %v846
        %v982 = vunpack.c.l.b16 %v847
        %v983 = vunpack.c.l.b16 %v848
        %v984 = vunpack.c.l.b16 %v849
        %v985 = vunpack.c.l.b16 %v850
        %v986 = vunpack.c.l.b16 %v851
        %v987 = vunpack.c.l.b16 %v852
        %v988 = vunpack.c.l.b16 %v853
        %v989 = vunpack.c.l.b16 %v854
        %v990 = vunpack.c.l.b16 %v855
        %v991 = vunpack.c.l.b16 %v856
        %v992 = vunpack.c.l.b16 %v857
        %v993 = vpack.c.b16 %v930, %v929
        %v994 = vpack.c.b16 %v932, %v931
        %v995 = vpack.c.b16 %v934, %v933
        %v996 = vpack.c.b16 %v936, %v935
        %v997 = vpack.c.b16 %v938, %v937
        %v998 = vpack.c.b16 %v940, %v939
        %v999 = vpack.c.b16 %v942, %v941
        %v1000 = vpack.c.b16 %v944, %v943
        %v1001 = vpack.c.b16 %v946, %v945
        %v1002 = vpack.c.b16 %v948, %v947
        %v1003 = vpack.c.b16 %v950, %v949
        %v1004 = vpack.c.b16 %v952, %v951
        %v1005 = vpack.c.b16 %v954, %v953
        %v1006 = vpack.c.b16 %v956, %v955
        %v1007 = vpack.c.b16 %v958, %v957
        %v1008 = vpack.c.b16 %v960, %v959
        %v1009 = vpack.c.b16 %v962, %v961
        %v1010 = vpack.c.b16 %v964, %v963
        %v1011 = vpack.c.b16 %v966, %v965
        %v1012 = vpack.c.b16 %v968, %v967
        %v1013 = vpack.c.b16 %v970, %v969
        %v1014 = vpack.c.b16 %v972, %v971
        %v1015 = vpack.c.b16 %v974, %v973
        %v1016 = vpack.c.b16 %v976, %v975
        %v1017 = vpack.c.b16 %v978, %v977
        %v1018 = vpack.c.b16 %v980, %v979
        %v1019 = vpack.c.b16 %v982, %v981
        %v1020 = vpack.c.b16 %v984, %v983
        %v1021 = vpack.c.b16 %v986, %v985
        %v1022 = vpack.c.b16 %v988, %v987
        %v1023 = vpack.c.b16 %v990, %v989
        %v1024 = vpack.c.b16 %v992, %v991
        %1057 = vmatprep.subr.bf16.mxu0 0
        %1058 = vmatpush1.bf16.msra.mxu0 %v993
        %1059 = vmatprep.subr.bf16.mxu0 0
        %1060 = vmatpush1.bf16.msra.mxu0 %v994
        %1061 = vmatprep.subr.bf16.mxu0 0
        %1062 = vmatpush1.bf16.msra.mxu0 %v995
        %1063 = vmatprep.subr.bf16.mxu0 0
        %1064 = vmatpush1.bf16.msra.mxu0 %v996
        %1065 = vmatprep.subr.bf16.mxu0 0
        %1066 = vmatpush1.bf16.msra.mxu0 %v997
        %1067 = vmatprep.subr.bf16.mxu0 0
        %1068 = vmatpush1.bf16.msra.mxu0 %v998
        %1069 = vmatprep.subr.bf16.mxu0 0
        %1070 = vmatpush1.bf16.msra.mxu0 %v999
        %1071 = vmatprep.subr.bf16.mxu0 0
        %1072 = vmatpush1.bf16.msra.mxu0 %v1000
        %1073 = vmatprep.subr.bf16.mxu0 0
        %1074 = vmatpush1.bf16.msra.mxu0 %v1001
        %1075 = vmatprep.subr.bf16.mxu0 0
        %1076 = vmatpush1.bf16.msra.mxu0 %v1002
        %1077 = vmatprep.subr.bf16.mxu0 0
        %1078 = vmatpush1.bf16.msra.mxu0 %v1003
        %1079 = vmatprep.subr.bf16.mxu0 0
        %1080 = vmatpush1.bf16.msra.mxu0 %v1004
        %1081 = vmatprep.subr.bf16.mxu0 0
        %1082 = vmatpush1.bf16.msra.mxu0 %v1005
        %1083 = vmatprep.subr.bf16.mxu0 0
        %1084 = vmatpush1.bf16.msra.mxu0 %v1006
        %1085 = vmatprep.subr.bf16.mxu0 0
        %1086 = vmatpush1.bf16.msra.mxu0 %v1007
        %1087 = vmatprep.subr.bf16.mxu0 0
        %1088 = vmatpush1.bf16.msra.mxu0 %v1008
        %1089 = vmatprep.mubr.bf16.mxu0 %v791
        %1090 = vmatmul.mubr.bf16.gmra.mrb[0].mxu0 %v790
        %v1091 = vpop.f32.mrb[0].mxu0
        %v1092 = vadd.f32 %v863, %v1091
        %v1093 = vpop.f32.mrb[0].mxu0
        %v1094 = vpop.f32.mrb[0].mxu0
        %v1095 = vadd.f32 %v863, %v1094
        %v1096 = vpop.f32.mrb[0].mxu0
        %1097 = vdwg.mxu0
        %1098 = vmatprep.subr.bf16.mxu0 0
        %1099 = vmatpush1.bf16.msra.mxu0 %v1009
        %1100 = vmatprep.subr.bf16.mxu0 0
        %1101 = vmatpush1.bf16.msra.mxu0 %v1010
        %1102 = vmatprep.subr.bf16.mxu0 0
        %1103 = vmatpush1.bf16.msra.mxu0 %v1011
        %1104 = vmatprep.subr.bf16.mxu0 0
        %1105 = vmatpush1.bf16.msra.mxu0 %v1012
        %1106 = vmatprep.subr.bf16.mxu0 0
        %1107 = vmatpush1.bf16.msra.mxu0 %v1013
        %1108 = vmatprep.subr.bf16.mxu0 0
        %1109 = vmatpush1.bf16.msra.mxu0 %v1014
        %1110 = vmatprep.subr.bf16.mxu0 0
        %1111 = vmatpush1.bf16.msra.mxu0 %v1015
        %1112 = vmatprep.subr.bf16.mxu0 0
        %1113 = vmatpush1.bf16.msra.mxu0 %v1016
        %1114 = vmatprep.subr.bf16.mxu0 0
        %1115 = vmatpush1.bf16.msra.mxu0 %v1017
        %1116 = vmatprep.subr.bf16.mxu0 0
        %1117 = vmatpush1.bf16.msra.mxu0 %v1018
        %1118 = vmatprep.subr.bf16.mxu0 0
        %1119 = vmatpush1.bf16.msra.mxu0 %v1019
        %1120 = vmatprep.subr.bf16.mxu0 0
        %1121 = vmatpush1.bf16.msra.mxu0 %v1020
        %1122 = vmatprep.subr.bf16.mxu0 0
        %1123 = vmatpush1.bf16.msra.mxu0 %v1021
        %1124 = vmatprep.subr.bf16.mxu0 0
        %1125 = vmatpush1.bf16.msra.mxu0 %v1022
        %1126 = vmatprep.subr.bf16.mxu0 0
        %1127 = vmatpush1.bf16.msra.mxu0 %v1023
        %1128 = vmatprep.subr.bf16.mxu0 0
        %1129 = vmatpush1.bf16.msra.mxu0 %v1024
        %1130 = vmatprep.mubr.bf16.mxu0 %v793
        %1131 = vmatmul.mubr.bf16.gmra.mrb[0].mxu0 %v792
        %v1132 = vpop.f32.mrb[0].mxu0
        %v1133 = vadd.f32 %v1092, %v1132
        %v1134 = vpop.f32.mrb[0].mxu0
        %v1135 = vpop.f32.mrb[0].mxu0
        %v1136 = vadd.f32 %v1095, %v1135
        %v1137 = vpop.f32.mrb[0].mxu0
        %1138 = vdwg.mxu0
        %vm1139 = vcmask 31744
        %v1140 = vsel %vm1139, %v1133, -inf
        %1141 = vmax.xlane.f32.xlu0 %v1140
        %v1142 = vpop.xlane.xlu0 %1141
        %v1143 = vsel %vm1139, %v1136, -inf
        %1144 = vmax.xlane.f32.xlu0 %v1143
        %v1145 = vpop.xlane.xlu0 %1144
        %v1146 = vsub.f32 %v1133, %v1142
        %v1147 = vsub.f32 %v1136, %v1145
        %v1148 = vmul.f32 %v1146, 1.442695
        %v1149 = vpow.pop %v1148
        %v1150 = vmul.f32 %v1147, 1.442695
        %v1151 = vpow.pop %v1150
        %v1152 = vsel %vm1139, %v1149, 0.0
        %1153 = vadd.xlane.f32.xlu0 %v1152
        %v1154 = vpop.xlane.xlu0 %1153
        %v1155 = vsel %vm1139, %v1151, 0.0
        %1156 = vadd.xlane.f32.xlu0 %v1155
        %v1157 = vpop.xlane.xlu0 %1156
        %v1158 = vlaneseq
        %v1159 = vshrl.u32 %v1158, 7
        %v1160 = vadd.s32 %v1159, 8
        %s1161 = smul.u32 %s28, 16
        %v1162 = vstv %s1161
        %v1163 = vadd.s32 %v1162, %v1159
        %v1164 = vadd.s32 %v1162, %v1160
        %vm1165 = vcmp.lt.s32.totalorder %v1163, 40
        %vm1166 = vcmp.lt.s32.totalorder %v1164, 40
        %v1167 = vsel %vm1165, %v1154, inf
        %v1168 = vsel %vm1166, %v1157, inf
        %v1169 = vmin.f32 %v1167, %v1168
        %v1170 = vrot.slane %v1169, 4
        %v1171 = vmin.f32 %v1169, %v1170
        %v1172 = vrot.slane %v1171, 2
        %v1173 = vmin.f32 %v1171, %v1172
        %v1174 = vrot.slane %v1173, 1
        %v1175 = vmin.f32 %v1173, %v1174
        %vm1176 = vcmp.eq.f32.partialorder %v1167, %v1175
        %vm1177 = vcmp.eq.f32.partialorder %v1168, %v1175
        %v1178 = vsel %vm1176, %v1159, 16
        %v1179 = vsel %vm1177, %v1160, 16
        %vm1180 = vcmp.lt.s32.totalorder %v1178, %v1179
        %v1181 = vsel %vm1180, %v1178, %v1179
        %v1182 = vrot.slane %v1181, 4
        %vm1183 = vcmp.lt.s32.totalorder %v1181, %v1182
        %v1184 = vsel %vm1183, %v1181, %v1182
        %v1185 = vrot.slane %v1184, 2
        %vm1186 = vcmp.lt.s32.totalorder %v1184, %v1185
        %v1187 = vsel %vm1186, %v1184, %v1185
        %v1188 = vrot.slane %v1187, 1
        %vm1189 = vcmp.lt.s32.totalorder %v1187, %v1188
        %v1190 = vsel %vm1189, %v1187, %v1188
        %vm1191 = vcmp.eq.s32.totalorder %v1159, %v1190
        %vm1192 = vcmp.eq.s32.totalorder %v1160, %v1190
        %v1193 = vsel %vm1191, 1, 0
        %v1194 = vsel %vm1192, 1, 0
        %vm1195 = vcmp.eq.s32.totalorder %v1193, 1
        %vm1196 = vcmp.eq.s32.totalorder %v1194, 1
        %v1197 = vsel %vm1195, %v1133, 0.0
        %v1198 = vsel %vm1196, %v1136, 0.0
        %v1199 = vsel %vm1139, %v1197, 0.0
        %v1200 = vsel %vm1139, %v1198, 0.0
        %v1201 = vadd.f32 %v1199, %v1200
        %v1202 = vrot.slane %v1201, 4
        %v1203 = vadd.f32 %v1201, %v1202
        %v1204 = vrot.slane %v1203, 2
        %v1205 = vadd.f32 %v1203, %v1204
        %v1206 = vrot.slane %v1205, 1
        %v1207 = vadd.f32 %v1205, %v1206
        %v1208 = vld [vmem:[#allocation2] sm:$0x1]
        %vm1209 = vcmp.lt.f32.partialorder %v1175, %v1208
        %v1210 = vsel %vm1209, %v1175, %v1208
        %vm1211 = vcmask 0
        %1212 = vst.msk [vmem:[#allocation2] sm:$0x1] %vm1211, %v1210
        %v1213 = vld [vmem:[#allocation3] sm:$0x1]
        %v1214 = vsel %vm1209, 1, 0
        %1215 = vset.pattern.permute.xlu0 0
        %1216 = vperm.xlu0 %1215, %v1214
        %v1217 = vpop.permute.xlu0 %1216
        %v1218 = vlaneseq
        %v1219 = vshrl.u32 %v1218, 7
        %v1220 = vsub.s32 0, %v1219
        %v1221 = vrot.slane %v1217, %v1220
        %vm1222 = vcmp.eq.s32.totalorder %v1221, 1
        %v1223 = vsel %vm1222, %v1207, %v1213
        %vm1224 = vcmask 24576
        %1225 = vst.msk [vmem:[#allocation3] sm:$0x1] %vm1224, %v1223
        %p1226 = scmp.eq.s32.totalorder %s28, 2
        // Predicated region
        $region53: #{tpu_custom_call.1} parent=39 // pred_check
          %p1227 = pneg %p1226
        $region54: #{tpu_custom_call.1} parent=39 // pred_check_branch
          %1229 = sbr.rel (%p1227) target = $region56
        $region55: #{tpu_custom_call.1} parent=39 // pred_region
          %v1230 = vld [vmem:[#allocation3] sm:$0x1]
          %v1231 = vxor.u32 %v1230, 2147483648
          %v1232 = vmul.f32 %v1231, 1.442695
          %v1233 = vpow.pop %v1232
          %v1234 = vadd.f32 %v1233, 1.0
          %v1235 = vrcp.pop %v1234
          %v1236 = vmul.f32 1.0, %v1235
          %1237 = vst.msk [vmem:[%s273] sm:$0x1] %vm1224, %v1236
        $region56: #{tpu_custom_call.1} parent=39 // pred_fallthru
          _
        %s1238 = sand.u32 %s155, 1
        %s1239 = scalar_lea.sflag [#allocation6], %s1238
        %s1240 = sand.u32 %s155, 1
        %s1241 = scalar_lea.vmem [#allocation9], %s1240
        // Predicated region
        $region57: #{tpu_custom_call.1} parent=39 // pred_check
          %p1242 = pneg %p165
        $region58: #{tpu_custom_call.1} parent=39 // pred_check_branch
          %1244 = sbr.rel (%p1242) target = $region60
        $region59: #{tpu_custom_call.1} parent=39 // pred_region
          %s1246 = ssub.s32 16, 16
          %1247 = vsyncadd %s1239, %s1246
          %s1248 = smul.addr %s27, 16
          %s1249 = scalar_lea.hbm %s5, %s1248
          %s1251 = sshll.u32 %s1241, 4
          %s1252 = int_to_ptr.vmem [resolvable:$true] %s1251
          %1254 = dma.vmem_to_hbm [thread:$0]  %s1252, 16, %s1249, %s1239
        $region60: #{tpu_custom_call.1} parent=39 // pred_fallthru
          _
      $region40: #{tpu_custom_call.1} parent=5 // pred_fallthru
        _
      %p1255 = scmp.le.s32.totalorder 2, %s18
      // Predicated region
      $region61: #{tpu_custom_call.1} parent=5 // pred_check
        %p1256 = pneg %p1255
      $region62: #{tpu_custom_call.1} parent=5 // pred_check_branch
        %1258 = sbr.rel (%p1256) target = $region64
      $region63: #{tpu_custom_call.1} parent=5 // pred_region
        %s1259 = ssub.s32 %s18, 2
        // Predicated region
        $region65: #{tpu_custom_call.1} parent=63 // pred_check
          %p1260 = pneg %p171
        $region66: #{tpu_custom_call.1} parent=63 // pred_check_branch
          %1262 = sbr.rel (%p1260) target = $region68
        $region67: #{tpu_custom_call.1} parent=63 // pred_region
          %s1263 = sand.u32 %s156, 1
          %s1264 = scalar_lea.sflag [#allocation6], %s1263
          %s1265 = sand.u32 %s156, 1
          %s1266 = scalar_lea.vmem [#allocation9], %s1265
          %1267 = dma.done %s1264, 16
        $region68: #{tpu_custom_call.1} parent=63 // pred_fallthru
          _
      $region64: #{tpu_custom_call.1} parent=5 // pred_fallthru
        _
    $region6: #{tpu_custom_call.1} parent=1 // loop_footer
      %s22 = sadd.s32 1, %s18
    $region7: #{tpu_custom_call.1} parent=1 // loop_footer_branch
      %17 = sbr.rel target = $region3
    $region8: #{tpu_custom_call.1} parent=1 // loop_exit
      _
    %1268 = vsyncpa [#allocation5], 1
    %s1269 = scalar_lea.sflag [#allocation5], 1
    %1270 = vsyncpa %s1269, 1
    %1271 = vsyncpa [#allocation8], 1
    %1272 = vsyncpa [#allocation6], 1
    %s1273 = scalar_lea.sflag [#allocation6], 1
    %1274 = vsyncpa %s1273, 1

</llo_original>
